<compile_context>
chip_gen: v7x
topology: tpu7x:2x2x1
jax: 0.10.0
libtpu: 0.0.40
codegen_flags: <defaults>
</compile_context>

<pallas_src>
import functools

import jax
import jax.numpy as jnp
from jax.experimental import pallas as pl
from jax.experimental.pallas import tpu as pltpu


# ----------------------------------------------------------------------------
# Small helpers
# ----------------------------------------------------------------------------
def _round_up(n, m):
    return ((n + m - 1) // m) * m


def _choose_tm(M, D, itemsize, *, max_tm=512):
    """Pick an M-tile: as large as possible (HBM roofline), VMEM-budgeted,
    never larger than the (sublane-padded) M, and preferring >= 2 grid steps
    so megacore (v7x, 2 TC/chip) can shard the 'parallel' axis."""
    tm = max_tm
    # Double-buffered x block + out block must stay well under the scoped
    # VMEM limit (v7x default 32 MiB): 2 bufs * 2 arrays * tm * D * itemsize.
    budget = 24 * 1024 * 1024
    while tm > 8 and 4 * tm * D * itemsize > budget:
        tm //= 2
    m_pad8 = _round_up(max(M, 1), 8)
    while tm > m_pad8 and tm > 8:
        tm //= 2
    tm = max(tm, 8)
    # Prefer at least 2 grid steps when there is enough work.
    if m_pad8 > 8 and pl.cdiv(m_pad8, tm) < 2 and tm > 8:
        tm //= 2
    return max(tm, 8)


def _vmem_limit_bytes(tm, D, weight_elems, itemsize):
    blocks = 2 * 2 * tm * D * itemsize          # double-buffered x + out tiles
    weights = 2 * weight_elems * 4              # resident weights (f32), 2x slack
    want = blocks + weights + (4 << 20)
    # Never below the v6e/v7x default (32 MiB), never above v7x physical (64 MiB).
    return int(min(max(want, 32 << 20), 64 << 20))


def _gelu_exact(x):
    # PyTorch F.gelu default = exact erf-based GELU.
    return 0.5 * x * (1.0 + jax.lax.erf(x * (1.0 / jnp.sqrt(2.0)).astype(x.dtype)))


# ----------------------------------------------------------------------------
# Kernels
# ----------------------------------------------------------------------------
def _pfeiffer_kernel(x_ref, wd_ref, bd_ref, wu_ref, bu_ref, o_ref):
    # x_ref:  [tm, D]      wd_ref: [D, Bp]   bd_ref: [1, Bp]
    # wu_ref: [Bp, D]      bu_ref: [1, D]    o_ref:  [tm, D]
    x = x_ref[...]
    h = jnp.dot(x, wd_ref[...], preferred_element_type=jnp.float32) + bd_ref[...]
    h = _gelu_exact(h)
    y = jnp.dot(h.astype(x.dtype), wu_ref[...],
                preferred_element_type=jnp.float32) + bu_ref[...]
    o_ref[...] = (y + x.astype(jnp.float32)).astype(o_ref.dtype)


def _lora_kernel(x_ref, a_ref, b_ref, o_ref):
    # x_ref: [tm, D]   a_ref: [D, Rp]   b_ref: [Rp, D] (scaling pre-folded)
    x = x_ref[...]
    h = jnp.dot(x, a_ref[...], preferred_element_type=jnp.float32)
    y = jnp.dot(h.astype(x.dtype), b_ref[...], preferred_element_type=jnp.float32)
    o_ref[...] = (x.astype(jnp.float32) + y).astype(o_ref.dtype)


# ----------------------------------------------------------------------------
# Wrappers (pallas_call plumbing)
# ----------------------------------------------------------------------------
def pfeiffer_forward(x, wd, bd, wu, bu, *, tm=None):
    """x: [..., D].  wd: [D, Bp], bd: [1, Bp], wu: [Bp, D], bu: [1, D]."""
    orig_shape = x.shape
    D = orig_shape[-1]
    Bp = wd.shape[1]
    x2 = x.reshape(-1, D)
    M = x2.shape[0]
    itemsize = jnp.dtype(x.dtype).itemsize

    if tm is None:
        tm = _choose_tm(M, D, itemsize)
    m_pad = _round_up(M, tm)
    if m_pad != M:
        x2 = jnp.pad(x2, ((0, m_pad - M), (0, 0)))
    grid = (m_pad // tm,)

    w_elems = D * Bp + Bp + Bp * D + D
    out = pl.pallas_call(
        _pfeiffer_kernel,
        out_shape=jax.ShapeDtypeStruct((m_pad, D), x.dtype),
        grid_spec=pltpu.PrefetchScalarGridSpec(
            num_scalar_prefetch=0,
            grid=grid,
            in_specs=[
                pl.BlockSpec((tm, D), lambda i: (i, 0)),
                pl.BlockSpec((D, Bp), lambda i: (0, 0)),
                pl.BlockSpec((1, Bp), lambda i: (0, 0)),
                pl.BlockSpec((Bp, D), lambda i: (0, 0)),
                pl.BlockSpec((1, D), lambda i: (0, 0)),
            ],
            out_specs=pl.BlockSpec((tm, D), lambda i: (i, 0)),
        ),
        compiler_params=pltpu.CompilerParams(
            dimension_semantics=("parallel",),
            vmem_limit_bytes=_vmem_limit_bytes(tm, D, w_elems, itemsize),
        ),
    )(x2, wd, bd, wu, bu)
    if m_pad != M:
        out = out[:M]
    return out.reshape(orig_shape)


def lora_forward(x, a_t, b_t_scaled, *, tm=None):
    """x: [..., D].  a_t: [D, Rp] (A.weight.T), b_t_scaled: [Rp, D] (scaling folded)."""
    orig_shape = x.shape
    D = orig_shape[-1]
    Rp = a_t.shape[1]
    x2 = x.reshape(-1, D)
    M = x2.shape[0]
    itemsize = jnp.dtype(x.dtype).itemsize

    if tm is None:
        tm = _choose_tm(M, D, itemsize)
    m_pad = _round_up(M, tm)
    if m_pad != M:
        x2 = jnp.pad(x2, ((0, m_pad - M), (0, 0)))
    grid = (m_pad // tm,)

    w_elems = D * Rp + Rp * D
    out = pl.pallas_call(
        _lora_kernel,
        out_shape=jax.ShapeDtypeStruct((m_pad, D), x.dtype),
        grid_spec=pltpu.PrefetchScalarGridSpec(
            num_scalar_prefetch=0,
            grid=grid,
            in_specs=[
                pl.BlockSpec((tm, D), lambda i: (i, 0)),
                pl.BlockSpec((D, Rp), lambda i: (0, 0)),
                pl.BlockSpec((Rp, D), lambda i: (0, 0)),
            ],
            out_specs=pl.BlockSpec((tm, D), lambda i: (i, 0)),
        ),
        compiler_params=pltpu.CompilerParams(
            dimension_semantics=("parallel",),
            vmem_limit_bytes=_vmem_limit_bytes(tm, D, w_elems, itemsize),
        ),
    )(x2, a_t, b_t_scaled)
    if m_pad != M:
        out = out[:M]
    return out.reshape(orig_shape)


# ----------------------------------------------------------------------------
# AdapterController (parameter container + dispatch; glue is plain Python/JAX)
# ----------------------------------------------------------------------------
class AdapterController:
    def __init__(self, adapter_config):
        self.adapter_config = adapter_config
        self.adapters = {}

    def add_adapter(self, adapter_name, adapter_type="pfeiffer", *, key, **kwargs):
        safe_name = adapter_name.replace(".", "_")
        if safe_name in self.adapters:
            return
        cfg = self.adapter_config
        init_scale = kwargs.get("init_scale", cfg.get("init_scale", 0.001))
        if adapter_type.lower() == "pfeiffer":
            D = kwargs.get("input_dim", cfg["input_dim"])
            B = kwargs.get("bottleneck_dim", cfg["bottleneck_dim"])
            Bp = _round_up(B, 128)  # lane-dense intermediate; extra cols/rows are zero
            k1, k2 = jax.random.split(key)
            # nn.Linear weight shapes: down (B, D), up (D, B); store transposed,
            # zero-padded along the bottleneck dim (numerically exact).
            wd = (init_scale * jax.random.normal(k1, (B, D), jnp.float32)).T
            wu = (init_scale * jax.random.normal(k2, (D, B), jnp.float32)).T
            wd = jnp.pad(wd, ((0, 0), (0, Bp - B)))          # [D, Bp]
            wu = jnp.pad(wu, ((0, Bp - B), (0, 0)))          # [Bp, D]
            bd = jnp.zeros((1, Bp), jnp.float32)
            bu = jnp.zeros((1, D), jnp.float32)
            self.adapters[safe_name] = ("pfeiffer", (wd, bd, wu, bu))
        elif adapter_type.lower() == "lora":
            D = kwargs.get("input_dim", cfg["input_dim"])
            O = kwargs.get("output_dim", cfg["output_dim"])
            R = kwargs.get("rank", cfg["rank"])
            alpha = kwargs.get("alpha", cfg.get("alpha", 1.0))
            assert O == D, "residual add requires output_dim == input_dim"
            Rp = _round_up(R, 128)
            scaling = alpha / R
            # A.weight: (R, D) ~ N(0, init_scale); B.weight: (O, R) zeros.
            a_t = (init_scale * jax.random.normal(key, (R, D), jnp.float32)).T
            b_t = jnp.zeros((O, R), jnp.float32).T
            a_t = jnp.pad(a_t, ((0, 0), (0, Rp - R)))        # [D, Rp]
            b_t = jnp.pad(b_t, ((0, Rp - R), (0, 0)))        # [Rp, D]
            b_t_scaled = b_t * scaling                        # fold scale once
            self.adapters[safe_name] = ("lora", (a_t, b_t_scaled))
        else:
            raise ValueError(f"Adapter type {adapter_type} not supported")

    def forward(self, x, adapter_name):
        safe_name = adapter_name.replace(".", "_")
        if safe_name not in self.adapters:
            raise ValueError(f"Adapter {adapter_name} not found")
        kind, params = self.adapters[safe_name]
        if kind == "pfeiffer":
            wd, bd, wu, bu = params
            return pfeiffer_forward(x, wd, bd, wu, bu)
        else:
            a_t, b_t_scaled = params
            return lora_forward(x, a_t, b_t_scaled)


# ----------------------------------------------------------------------------
# Pure-JAX references for checking (use the stored/padded params; identical math)
# ----------------------------------------------------------------------------
def _pfeiffer_ref(x, wd, bd, wu, bu):
    h = x @ wd + bd[0]
    h = 0.5 * h * (1.0 + jax.lax.erf(h / jnp.sqrt(2.0)))
    return h @ wu + bu[0] + x


def _lora_ref(x, a_t, b_t_scaled):
    return x + (x @ a_t) @ b_t_scaled


if __name__ == "__main__":
    key = jax.random.PRNGKey(0)
    k_x, k_x2, k_pf, k_lo = jax.random.split(key, 4)

    batch, seq, hidden = 2, 8, 32
    bottleneck, rank = 16, 8

    controller = AdapterController({
        "input_dim": hidden, "output_dim": hidden,
        "bottleneck_dim": bottleneck, "rank": rank,
        "activation": "gelu", "alpha": 1.0, "init_scale": 0.001,
    })
    controller.add_adapter("task.pfeiffer", "pfeiffer", key=k_pf)
    controller.add_adapter("user.lora", "lora", key=k_lo)

    x = jax.random.normal(k_x, (batch, seq, hidden), jnp.float32)

    y_pf = controller.forward(x, "task.pfeiffer")
    y_lo = controller.forward(x, "user.lora")
    jax.block_until_ready((y_pf, y_lo))

    # correctness checks vs pure-JAX reference
    _, (wd, bd, wu, bu) = controller.adapters["task_pfeiffer"]
    _, (a_t, b_t_scaled) = controller.adapters["user_lora"]
    ref_pf = _pfeiffer_ref(x.reshape(-1, hidden), wd, bd, wu, bu).reshape(x.shape)
    ref_lo = _lora_ref(x.reshape(-1, hidden), a_t, b_t_scaled).reshape(x.shape)
    assert jnp.allclose(y_pf, ref_pf, atol=1e-5, rtol=1e-5)
    assert jnp.allclose(y_lo, ref_lo, atol=1e-5, rtol=1e-5)

    # exercise the padded / non-divisible M path (batch*seq not a multiple of 8)
    x_odd = jax.random.normal(k_x2, (1, 5, hidden), jnp.float32)
    y_odd = controller.forward(x_odd, "task.pfeiffer")
    jax.block_until_ready(y_odd)
    ref_odd = _pfeiffer_ref(x_odd.reshape(-1, hidden), wd, bd, wu, bu).reshape(x_odd.shape)
    assert jnp.allclose(y_odd, ref_odd, atol=1e-5, rtol=1e-5)

    print("KERNEL_OK")
</pallas_src>

<mosaic_0001>
module attributes {stable_mosaic.version = 11 : i64} {
  func.func @_pfeiffer_kernel(%arg0: i32, %arg1: memref<8x32xf32, #tpu.memory_space<vmem>>, %arg2: memref<32x128xf32, #tpu.memory_space<vmem>>, %arg3: memref<1x128xf32, #tpu.memory_space<vmem>>, %arg4: memref<128x32xf32, #tpu.memory_space<vmem>>, %arg5: memref<1x32xf32, #tpu.memory_space<vmem>>, %arg6: memref<8x32xf32, #tpu.memory_space<vmem>>) attributes {dimension_semantics = [#tpu.dimension_semantics<parallel>], iteration_bounds = array<i64: 2>, scalar_prefetch = 0 : i64, scratch_operands = 0 : i64, tpu.core_type = #tpu.core_type<tc>, window_params = [{transform_indices = @transform_0, window_bounds = array<i64: 8, 32>}, {pipeline_mode = #tpu.pipeline_mode<synchronous>, transform_indices = @transform_1, window_bounds = array<i64: 32, 128>}, {pipeline_mode = #tpu.pipeline_mode<synchronous>, transform_indices = @transform_2, window_bounds = array<i64: 1, 128>}, {pipeline_mode = #tpu.pipeline_mode<synchronous>, transform_indices = @transform_3, window_bounds = array<i64: 128, 32>}, {pipeline_mode = #tpu.pipeline_mode<synchronous>, transform_indices = @transform_4, window_bounds = array<i64: 1, 32>}, {transform_indices = @transform_5, window_bounds = array<i64: 8, 32>}]} {
    %c0 = arith.constant 0 : index
    %c0_0 = arith.constant 0 : index
    %0 = vector.load %arg1[%c0, %c0_0] : memref<8x32xf32, #tpu.memory_space<vmem>>, vector<8x32xf32>
    %c0_1 = arith.constant 0 : index
    %c0_2 = arith.constant 0 : index
    %1 = vector.load %arg2[%c0_1, %c0_2] : memref<32x128xf32, #tpu.memory_space<vmem>>, vector<32x128xf32>
    %cst = arith.constant dense<0.000000e+00> : vector<8x128xf32>
    %2 = tpu.matmul %0, %1, %cst {dimension_numbers = #tpu.dot_dimension_numbers<[1], [0], [0], [1], [0, 0, 1, 1], [], []>} : vector<8x32xf32>, vector<32x128xf32>, vector<8x128xf32> -> vector<8x128xf32>
    %c0_3 = arith.constant 0 : index
    %c0_4 = arith.constant 0 : index
    %3 = vector.load %arg3[%c0_3, %c0_4] : memref<1x128xf32, #tpu.memory_space<vmem>>, vector<1x128xf32>
    %4 = vector.broadcast %3 : vector<1x128xf32> to vector<8x128xf32>
    %5 = arith.addf %2, %4 : vector<8x128xf32>
    %cst_5 = arith.constant 5.000000e-01 : f32
    %6 = vector.broadcast %cst_5 : f32 to vector<8x128xf32>
    %7 = arith.mulf %6, %5 : vector<8x128xf32>
    %cst_6 = arith.constant 2.000000e+00 : f32
    %8 = math.sqrt %cst_6 : f32
    %cst_7 = arith.constant 1.000000e+00 : f32
    %9 = arith.divf %cst_7, %8 : f32
    %10 = vector.broadcast %9 : f32 to vector<8x128xf32>
    %11 = arith.mulf %5, %10 : vector<8x128xf32>
    %12 = math.erf %11 : vector<8x128xf32>
    %cst_8 = arith.constant 1.000000e+00 : f32
    %13 = vector.broadcast %cst_8 : f32 to vector<8x128xf32>
    %14 = arith.addf %13, %12 : vector<8x128xf32>
    %15 = arith.mulf %7, %14 : vector<8x128xf32>
    %c0_9 = arith.constant 0 : index
    %c0_10 = arith.constant 0 : index
    %16 = vector.load %arg4[%c0_9, %c0_10] : memref<128x32xf32, #tpu.memory_space<vmem>>, vector<128x32xf32>
    %cst_11 = arith.constant dense<0.000000e+00> : vector<8x32xf32>
    %17 = tpu.matmul %15, %16, %cst_11 {dimension_numbers = #tpu.dot_dimension_numbers<[1], [0], [0], [1], [0, 0, 1, 1], [], []>} : vector<8x128xf32>, vector<128x32xf32>, vector<8x32xf32> -> vector<8x32xf32>
    %c0_12 = arith.constant 0 : index
    %c0_13 = arith.constant 0 : index
    %18 = vector.load %arg5[%c0_12, %c0_13] : memref<1x32xf32, #tpu.memory_space<vmem>>, vector<1x32xf32>
    %19 = vector.broadcast %18 : vector<1x32xf32> to vector<8x32xf32>
    %20 = arith.addf %17, %19 : vector<8x32xf32>
    %21 = arith.addf %20, %0 : vector<8x32xf32>
    %c0_14 = arith.constant 0 : index
    %c0_15 = arith.constant 0 : index
    %22 = vector.load %arg6[%c0_14, %c0_15] : memref<8x32xf32, #tpu.memory_space<vmem>>, vector<8x32xf32>
    tpu.vector_store %arg6[%c0_14, %c0_15], %21 {strides = array<i32>} : memref<8x32xf32, #tpu.memory_space<vmem>>, vector<8x32xf32>,
    return
  }
  func.func @transform_0(%arg0: i32) -> (i32, i32) {
    %c0_i32 = arith.constant 0 : i32
    %c0_i32_0 = arith.constant 0 : i32
    return %arg0, %c0_i32 : i32, i32
  }
  func.func @transform_1(%arg0: i32) -> (i32, i32) {
    %c0_i32 = arith.constant 0 : i32
    %c0_i32_0 = arith.constant 0 : i32
    %c0_i32_1 = arith.constant 0 : i32
    return %c0_i32, %c0_i32_0 : i32, i32
  }
  func.func @transform_2(%arg0: i32) -> (i32, i32) {
    %c0_i32 = arith.constant 0 : i32
    %c0_i32_0 = arith.constant 0 : i32
    %c0_i32_1 = arith.constant 0 : i32
    return %c0_i32, %c0_i32_0 : i32, i32
  }
  func.func @transform_3(%arg0: i32) -> (i32, i32) {
    %c0_i32 = arith.constant 0 : i32
    %c0_i32_0 = arith.constant 0 : i32
    %c0_i32_1 = arith.constant 0 : i32
    return %c0_i32, %c0_i32_0 : i32, i32
  }
  func.func @transform_4(%arg0: i32) -> (i32, i32) {
    %c0_i32 = arith.constant 0 : i32
    %c0_i32_0 = arith.constant 0 : i32
    %c0_i32_1 = arith.constant 0 : i32
    return %c0_i32, %c0_i32_0 : i32, i32
  }
  func.func @transform_5(%arg0: i32) -> (i32, i32) {
    %c0_i32 = arith.constant 0 : i32
    %c0_i32_0 = arith.constant 0 : i32
    return %arg0, %c0_i32 : i32, i32
  }
}

</mosaic_0001>

<llo_original>
// kernel: tpu_custom_call.1
$region0: #{tpu_custom_call.1}
  #allocation0 [shape = 'u32[]', space=smem, size = 0x4, offset = 0x4, fixed_abs, tag = 'smem constant byte address 0x4 - core index']
  #allocation1 [shape = 'u32[144,128]{1,0:T(1,128)}', space=vmem, size = 0x12000, scoped, tag = 'internal scratch']
  %s0 = inlined_call_operand.vmem [shape: f32[16,32], index: 0, kind: input, shape index: {}]
  %s1 = inlined_call_operand.vmem [shape: f32[32,128], index: 1, kind: input, shape index: {}]
  %s2 = inlined_call_operand.vmem [shape: f32[1,128], index: 2, kind: input, shape index: {}]
  %s3 = inlined_call_operand.vmem [shape: f32[128,32], index: 3, kind: input, shape index: {}]
  %s4 = inlined_call_operand.vmem [shape: f32[1,32], index: 4, kind: input, shape index: {}]
  %s5 = inlined_call_operand.hbm [shape: f32[16,32], index: 5, kind: output, shape index: {}]
  %s6 = sld [smem:[#allocation0]]
  $region53: #{tpu_custom_call.1} parent=0
    _
  %s8 = ssub.s32 1, %s6
  %s9 = scalar_select 0, %s8, %s6
  $region1: #{tpu_custom_call.1} parent=0
    #allocation2 [shape = 'u8[8192]{0}', space=vmem, size = 0x2000, scoped, tag = 'output window, operand 0']
    #allocation3 [shape = 's32[2]{0}', space=sflag, size = 0x8, scoped, tag = 'scoped memory for tpu_custom_call.1']
    %10 = vsyncpa [#allocation3], 0
    %s11 = scalar_lea.sflag [#allocation3], 1
    %12 = vsyncpa %s11, 0
    loop: start=0, step=1, limit=4
    $region2: #{tpu_custom_call.1} parent=1 // loop_pre_header
      _
    $region3: #{tpu_custom_call.1} parent=1 // loop_header
      %s14 = sphi 0, %s18
      %p15 = scmp.ge.s32.totalorder %s14, 4
      %s24 = sphi 0, %s26
      %s27 = sphi 0, %s24
      %s28 = sphi 0, %s27
      %s44 = sphi 0, %s28
      %s48 = sphi 0, %s48
      %s50 = sphi 0, %s48
      %s51 = sphi 0, %s50
      %s65 = sphi 0, %s51
      %s69 = sphi 0, %s69
      %s71 = sphi 0, %s69
      %s72 = sphi 0, %s71
      %s86 = sphi 0, %s72
      %s90 = sphi 0, %s90
      %s92 = sphi 0, %s90
      %s93 = sphi 0, %s92
      %s107 = sphi 0, %s93
      %s111 = sphi 0, %s111
      %s113 = sphi 0, %s111
      %s114 = sphi 0, %s113
      %s128 = sphi 0, %s114
      %s134 = sphi 0, %s136
      %s137 = sphi 0, %s134
      %s138 = sphi 0, %s137
      %s154 = sphi 0, %s138
    $region4: #{tpu_custom_call.1} parent=1 // loop_header_branch
      %17 = sbr.rel (%p15) target = $region8
    $region5: #{tpu_custom_call.1} parent=1 // loop_body
      %s19 = ssub.s32 %s14, 1
      %s20 = ssub.s32 %s14, 2
      %s21 = sadd.s32 %s14, 1
      %s22 = ssub.s32 %s14, %s21
      %p23 = scmp.eq.s32.totalorder %s22, 0
      %s25 = sadd.s32 %s24, 1
      %s26 = scalar_select %p23, %s24, %s25
      %p29 = pneg %p23
      %p30 = scmp.eq.s32.totalorder %s14, 1
      %p31 = por %p29, %p30
      %p32 = scmp.ne.s32.totalorder %s24, %s27
      %p33 = scmp.eq.s32.totalorder %s14, 0
      %p34 = por %p32, %p33
      %p35 = scmp.ne.s32.totalorder %s24, %s27
      %p36 = scmp.eq.s32.totalorder %s19, 1
      %p37 = por %p35, %p36
      %p38 = scmp.ne.s32.totalorder %s27, %s28
      %p39 = scmp.eq.s32.totalorder %s19, 0
      %p40 = por %p38, %p39
      %p41 = scmp.ne.s32.totalorder %s27, %s28
      %p42 = scmp.eq.s32.totalorder %s20, 1
      %p43 = por %p41, %p42
      %p45 = scmp.ne.s32.totalorder %s28, %s44
      %p46 = scmp.eq.s32.totalorder %s20, 0
      %p47 = por %p45, %p46
      %s49 = sadd.s32 %s48, 1
      %p52 = scmp.eq.s32.totalorder %s14, 1
      %p53 = scmp.ne.s32.totalorder %s48, %s50
      %p54 = scmp.eq.s32.totalorder %s14, 0
      %p55 = por %p53, %p54
      %p56 = scmp.ne.s32.totalorder %s48, %s50
      %p57 = scmp.eq.s32.totalorder %s19, 1
      %p58 = por %p56, %p57
      %p59 = scmp.ne.s32.totalorder %s50, %s51
      %p60 = scmp.eq.s32.totalorder %s19, 0
      %p61 = por %p59, %p60
      %p62 = scmp.ne.s32.totalorder %s50, %s51
      %p63 = scmp.eq.s32.totalorder %s20, 1
      %p64 = por %p62, %p63
      %p66 = scmp.ne.s32.totalorder %s51, %s65
      %p67 = scmp.eq.s32.totalorder %s20, 0
      %p68 = por %p66, %p67
      %s70 = sadd.s32 %s69, 1
      %p73 = scmp.eq.s32.totalorder %s14, 1
      %p74 = scmp.ne.s32.totalorder %s69, %s71
      %p75 = scmp.eq.s32.totalorder %s14, 0
      %p76 = por %p74, %p75
      %p77 = scmp.ne.s32.totalorder %s69, %s71
      %p78 = scmp.eq.s32.totalorder %s19, 1
      %p79 = por %p77, %p78
      %p80 = scmp.ne.s32.totalorder %s71, %s72
      %p81 = scmp.eq.s32.totalorder %s19, 0
      %p82 = por %p80, %p81
      %p83 = scmp.ne.s32.totalorder %s71, %s72
      %p84 = scmp.eq.s32.totalorder %s20, 1
      %p85 = por %p83, %p84
      %p87 = scmp.ne.s32.totalorder %s72, %s86
      %p88 = scmp.eq.s32.totalorder %s20, 0
      %p89 = por %p87, %p88
      %s91 = sadd.s32 %s90, 1
      %p94 = scmp.eq.s32.totalorder %s14, 1
      %p95 = scmp.ne.s32.totalorder %s90, %s92
      %p96 = scmp.eq.s32.totalorder %s14, 0
      %p97 = por %p95, %p96
      %p98 = scmp.ne.s32.totalorder %s90, %s92
      %p99 = scmp.eq.s32.totalorder %s19, 1
      %p100 = por %p98, %p99
      %p101 = scmp.ne.s32.totalorder %s92, %s93
      %p102 = scmp.eq.s32.totalorder %s19, 0
      %p103 = por %p101, %p102
      %p104 = scmp.ne.s32.totalorder %s92, %s93
      %p105 = scmp.eq.s32.totalorder %s20, 1
      %p106 = por %p104, %p105
      %p108 = scmp.ne.s32.totalorder %s93, %s107
      %p109 = scmp.eq.s32.totalorder %s20, 0
      %p110 = por %p108, %p109
      %s112 = sadd.s32 %s111, 1
      %p115 = scmp.eq.s32.totalorder %s14, 1
      %p116 = scmp.ne.s32.totalorder %s111, %s113
      %p117 = scmp.eq.s32.totalorder %s14, 0
      %p118 = por %p116, %p117
      %p119 = scmp.ne.s32.totalorder %s111, %s113
      %p120 = scmp.eq.s32.totalorder %s19, 1
      %p121 = por %p119, %p120
      %p122 = scmp.ne.s32.totalorder %s113, %s114
      %p123 = scmp.eq.s32.totalorder %s19, 0
      %p124 = por %p122, %p123
      %p125 = scmp.ne.s32.totalorder %s113, %s114
      %p126 = scmp.eq.s32.totalorder %s20, 1
      %p127 = por %p125, %p126
      %p129 = scmp.ne.s32.totalorder %s114, %s128
      %p130 = scmp.eq.s32.totalorder %s20, 0
      %p131 = por %p129, %p130
      %s132 = ssub.s32 %s14, %s21
      %p133 = scmp.eq.s32.totalorder %s132, 0
      %s135 = sadd.s32 %s134, 1
      %s136 = scalar_select %p133, %s134, %s135
      %p139 = pneg %p133
      %p140 = scmp.eq.s32.totalorder %s14, 1
      %p141 = por %p139, %p140
      %p142 = scmp.ne.s32.totalorder %s134, %s137
      %p143 = scmp.eq.s32.totalorder %s14, 0
      %p144 = por %p142, %p143
      %p145 = scmp.ne.s32.totalorder %s134, %s137
      %p146 = scmp.eq.s32.totalorder %s19, 1
      %p147 = por %p145, %p146
      %p148 = scmp.ne.s32.totalorder %s137, %s138
      %p149 = scmp.eq.s32.totalorder %s19, 0
      %p150 = por %p148, %p149
      %p151 = scmp.ne.s32.totalorder %s137, %s138
      %p152 = scmp.eq.s32.totalorder %s20, 1
      %p153 = por %p151, %p152
      %p155 = scmp.ne.s32.totalorder %s138, %s154
      %p156 = scmp.eq.s32.totalorder %s20, 0
      %p157 = por %p155, %p156
      %p158 = scmp.le.s32.totalorder 1, %s14
      %p159 = scmp.lt.s32.totalorder %s14, 3
      %p160 = pnand %p158, %p159
      %p161 = pneg %p160
      // Predicated region
      $region9: #{tpu_custom_call.1} parent=5 // pred_check
        _
      $region10: #{tpu_custom_call.1} parent=5 // pred_check_branch
        %163 = sbr.rel (%p160) target = $region12
      $region11: #{tpu_custom_call.1} parent=5 // pred_region
        %s164 = ssub.s32 %s14, 1
        // Predicated region
        $region13: #{tpu_custom_call.1} parent=11 // pred_check
          %p165 = pneg %p61
        $region14: #{tpu_custom_call.1} parent=11 // pred_check_branch
          %167 = sbr.rel (%p165) target = $region16
        $region15: #{tpu_custom_call.1} parent=11 // pred_region
          _
        $region16: #{tpu_custom_call.1} parent=11 // pred_fallthru
          _
        // Predicated region
        $region17: #{tpu_custom_call.1} parent=11 // pred_check
          %p168 = pneg %p82
        $region18: #{tpu_custom_call.1} parent=11 // pred_check_branch
          %170 = sbr.rel (%p168) target = $region20
        $region19: #{tpu_custom_call.1} parent=11 // pred_region
          _
        $region20: #{tpu_custom_call.1} parent=11 // pred_fallthru
          _
        // Predicated region
        $region21: #{tpu_custom_call.1} parent=11 // pred_check
          %p171 = pneg %p103
        $region22: #{tpu_custom_call.1} parent=11 // pred_check_branch
          %173 = sbr.rel (%p171) target = $region24
        $region23: #{tpu_custom_call.1} parent=11 // pred_region
          _
        $region24: #{tpu_custom_call.1} parent=11 // pred_fallthru
          _
        // Predicated region
        $region25: #{tpu_custom_call.1} parent=11 // pred_check
          %p174 = pneg %p124
        $region26: #{tpu_custom_call.1} parent=11 // pred_check_branch
          %176 = sbr.rel (%p174) target = $region28
        $region27: #{tpu_custom_call.1} parent=11 // pred_region
          _
        $region28: #{tpu_custom_call.1} parent=11 // pred_fallthru
          _
      $region12: #{tpu_custom_call.1} parent=5 // pred_fallthru
        _
      %p177 = scmp.lt.s32.totalorder %s14, 2
      // Predicated region
      $region29: #{tpu_custom_call.1} parent=5 // pred_check
        %p178 = pneg %p177
      $region30: #{tpu_custom_call.1} parent=5 // pred_check_branch
        %180 = sbr.rel (%p178) target = $region32
      $region31: #{tpu_custom_call.1} parent=5 // pred_region
        // Predicated region
        $region33: #{tpu_custom_call.1} parent=31 // pred_check
          %p181 = pneg %p34
        $region34: #{tpu_custom_call.1} parent=31 // pred_check_branch
          %183 = sbr.rel (%p181) target = $region36
        $region35: #{tpu_custom_call.1} parent=31 // pred_region
          %p184 = scmp.lt.s32.totalorder %s14, 1
          %s185 = scalar_select %p184, %s14, 1
          %s186 = smul.addr %s185, 8
          %s187 = scalar_lea.vmem %s0, %s186
        $region36: #{tpu_custom_call.1} parent=31 // pred_fallthru
          _
      $region32: #{tpu_custom_call.1} parent=5 // pred_fallthru
        _
      %p188 = scmp.le.s32.totalorder 1, %s14
      %p189 = scmp.lt.s32.totalorder %s14, 3
      %p190 = pnand %p188, %p189
      %p191 = pneg %p190
      // Predicated region
      $region37: #{tpu_custom_call.1} parent=5 // pred_check
        _
      $region38: #{tpu_custom_call.1} parent=5 // pred_check_branch
        %193 = sbr.rel (%p190) target = $region40
      $region39: #{tpu_custom_call.1} parent=5 // pred_region
        %s194 = ssub.s32 %s14, 1
        %p195 = scmp.lt.s32.totalorder %s19, 1
        %s196 = scalar_select %p195, %s19, 1
        %s197 = smul.addr %s196, 8
        %s198 = scalar_lea.vmem %s0, %s197
        %p199 = pneg %p40
        %p200 = pneg %p37
        %p201 = pneg %p61
        %p202 = pneg %p58
        %p203 = pneg %p82
        %p204 = pneg %p79
        %p205 = pneg %p103
        %p206 = pneg %p100
        %p207 = pneg %p124
        %p208 = pneg %p121
        %p209 = pneg %p150
        %p210 = pneg %p147
        %s211 = sand.u32 %s137, 1
        %s212 = scalar_lea.sflag [#allocation3], %s211
        %s213 = sand.u32 %s137, 1
        %s214 = smul.addr %s213, 8
        %s215 = scalar_lea.vmem [#allocation2], %s214
        %p216 = scmp.lt.s32.totalorder %s19, 1
        %s217 = scalar_select %p216, %s19, 1
        %s218 = smul.addr %s217, 8
        %s219 = scalar_lea.vmem %s0, %s218
        %v220 = vld [vmem:[%s219] sm:$0xff]
        %v221 = vld [vmem:[%s1] sm:$0xff]
        %v222 = vld [vmem:[%s1 + $0x8] sm:$0xff]
        %v223 = vld [vmem:[%s1 + $0x10] sm:$0xff]
        %v224 = vld [vmem:[%s1 + $0x18] sm:$0xff]
        %v225 = vld [vmem:[%s2] sm:$0x1]
        %v227 = vlaneseq
        %v228 = vshrl.u32 %v227, 7
        %v229 = vsub.s32 0, %v228
        %v230 = vrot.slane %v225, %v229
        %vm232 = vcmask 261120
        %v234 = vsel %vm232, %v220, 0
        %236 = vmatprep.subr.mxu0 0.0
        %237 = vmatpush1.msra.mxu0 %v221
        %238 = vmatprep.subr.mxu0 0.0
        %239 = vmatpush1.msra.mxu0 %v222
        %240 = vmatprep.subr.mxu0 0.0
        %241 = vmatpush1.msra.mxu0 %v223
        %242 = vmatprep.subr.mxu0 0.0
        %243 = vmatpush1.msra.mxu0 %v224
        %244 = vmatprep.subr.mxu0 0.0
        %245 = vmatpush1.msra.mxu0 0.0
        %246 = vmatprep.subr.mxu0 0.0
        %247 = vmatpush1.msra.mxu0 0.0
        %248 = vmatprep.subr.mxu0 0.0
        %249 = vmatpush1.msra.mxu0 0.0
        %250 = vmatprep.subr.mxu0 0.0
        %251 = vmatpush1.msra.mxu0 0.0
        %252 = vmatprep.subr.mxu0 0.0
        %253 = vmatpush1.msra.mxu0 0.0
        %254 = vmatprep.subr.mxu0 0.0
        %255 = vmatpush1.msra.mxu0 0.0
        %256 = vmatprep.subr.mxu0 0.0
        %257 = vmatpush1.msra.mxu0 0.0
        %258 = vmatprep.subr.mxu0 0.0
        %259 = vmatpush1.msra.mxu0 0.0
        %260 = vmatprep.subr.mxu0 0.0
        %261 = vmatpush1.msra.mxu0 0.0
        %262 = vmatprep.subr.mxu0 0.0
        %263 = vmatpush1.msra.mxu0 0.0
        %264 = vmatprep.subr.mxu0 0.0
        %265 = vmatpush1.msra.mxu0 0.0
        %266 = vmatprep.subr.mxu0 0.0
        %267 = vmatpush1.msra.mxu0 0.0
        %268 = vmatprep.subr.mxu0 0.0
        %269 = vmatpush1.msra.mxu0 0.0
        %270 = vmatprep.subr.mxu0 0.0
        %271 = vmatpush1.msra.mxu0 0.0
        %272 = vmatprep.subr.mxu0 0.0
        %273 = vmatpush1.msra.mxu0 0.0
        %274 = vmatprep.subr.mxu0 0.0
        %275 = vmatpush1.msra.mxu0 0.0
        %276 = vmatprep.subr.mxu0 0.0
        %277 = vmatpush1.msra.mxu0 0.0
        %278 = vmatprep.subr.mxu0 0.0
        %279 = vmatpush1.msra.mxu0 0.0
        %280 = vmatprep.subr.mxu0 0.0
        %281 = vmatpush1.msra.mxu0 0.0
        %282 = vmatprep.subr.mxu0 0.0
        %283 = vmatpush1.msra.mxu0 0.0
        %284 = vmatprep.subr.mxu0 0.0
        %285 = vmatpush1.msra.mxu0 0.0
        %286 = vmatprep.subr.mxu0 0.0
        %287 = vmatpush1.msra.mxu0 0.0
        %288 = vmatprep.subr.mxu0 0.0
        %289 = vmatpush1.msra.mxu0 0.0
        %290 = vmatprep.subr.mxu0 0.0
        %291 = vmatpush1.msra.mxu0 0.0
        %292 = vmatprep.subr.mxu0 0.0
        %293 = vmatpush1.msra.mxu0 0.0
        %294 = vmatprep.subr.mxu0 0.0
        %295 = vmatpush1.msra.mxu0 0.0
        %296 = vmatprep.subr.mxu0 0.0
        %297 = vmatpush1.msra.mxu0 0.0
        %298 = vmatprep.subr.mxu0 0.0
        %299 = vmatpush1.msra.mxu0 0.0
        %300 = vmatprep.mubr.f32.mxu0 0.0
        %301 = vmatmul.mubr.f32.gmra.mrb[0].mxu0 %v234
        %v302 = vpop.f32.mrb[0].mxu0
        %v303 = vadd.f32 %v230, %v302
        %v304 = vpop.f32.mrb[0].mxu0
        %305 = vdwg.mxu0
        %v306 = vmul.f32 %v303, 0.5
        %v307 = vmul.f32 %v303, 0.70710677
        %v308 = verf.f32.pop %v307
        %v309 = vadd.f32 %v308, 1.0
        %v310 = vmul.f32 %v306, %v309
        %v311 = vld [vmem:[%s3] sm:$0xff]
        %v312 = vld [vmem:[%s3 + $0x8] sm:$0xff]
        %v313 = vld [vmem:[%s3 + $0x10] sm:$0xff]
        %v314 = vld [vmem:[%s3 + $0x18] sm:$0xff]
        %v315 = vld [vmem:[%s3 + $0x20] sm:$0xff]
        %v316 = vld [vmem:[%s3 + $0x28] sm:$0xff]
        %v317 = vld [vmem:[%s3 + $0x30] sm:$0xff]
        %v318 = vld [vmem:[%s3 + $0x38] sm:$0xff]
        %v319 = vld [vmem:[%s3 + $0x40] sm:$0xff]
        %v320 = vld [vmem:[%s3 + $0x48] sm:$0xff]
        %v321 = vld [vmem:[%s3 + $0x50] sm:$0xff]
        %v322 = vld [vmem:[%s3 + $0x58] sm:$0xff]
        %v323 = vld [vmem:[%s3 + $0x60] sm:$0xff]
        %v324 = vld [vmem:[%s3 + $0x68] sm:$0xff]
        %v325 = vld [vmem:[%s3 + $0x70] sm:$0xff]
        %v326 = vld [vmem:[%s3 + $0x78] sm:$0xff]
        %v327 = vld [vmem:[%s4] sm:$0x1]
        %v329 = vlaneseq
        %v330 = vshrl.u32 %v329, 7
        %v331 = vsub.s32 0, %v330
        %v332 = vrot.slane %v327, %v331
        %334 = vmatprep.subr.mxu0 0.0
        %335 = vmatpush1.msra.mxu0 %v311
        %336 = vmatprep.subr.mxu0 0.0
        %337 = vmatpush1.msra.mxu0 %v312
        %338 = vmatprep.subr.mxu0 0.0
        %339 = vmatpush1.msra.mxu0 %v313
        %340 = vmatprep.subr.mxu0 0.0
        %341 = vmatpush1.msra.mxu0 %v314
        %342 = vmatprep.subr.mxu0 0.0
        %343 = vmatpush1.msra.mxu0 %v315
        %344 = vmatprep.subr.mxu0 0.0
        %345 = vmatpush1.msra.mxu0 %v316
        %346 = vmatprep.subr.mxu0 0.0
        %347 = vmatpush1.msra.mxu0 %v317
        %348 = vmatprep.subr.mxu0 0.0
        %349 = vmatpush1.msra.mxu0 %v318
        %350 = vmatprep.subr.mxu0 0.0
        %351 = vmatpush1.msra.mxu0 %v319
        %352 = vmatprep.subr.mxu0 0.0
        %353 = vmatpush1.msra.mxu0 %v320
        %354 = vmatprep.subr.mxu0 0.0
        %355 = vmatpush1.msra.mxu0 %v321
        %356 = vmatprep.subr.mxu0 0.0
        %357 = vmatpush1.msra.mxu0 %v322
        %358 = vmatprep.subr.mxu0 0.0
        %359 = vmatpush1.msra.mxu0 %v323
        %360 = vmatprep.subr.mxu0 0.0
        %361 = vmatpush1.msra.mxu0 %v324
        %362 = vmatprep.subr.mxu0 0.0
        %363 = vmatpush1.msra.mxu0 %v325
        %364 = vmatprep.subr.mxu0 0.0
        %365 = vmatpush1.msra.mxu0 %v326
        %366 = vmatprep.subr.mxu0 0.0
        %367 = vmatpush1.msra.mxu0 0.0
        %368 = vmatprep.subr.mxu0 0.0
        %369 = vmatpush1.msra.mxu0 0.0
        %370 = vmatprep.subr.mxu0 0.0
        %371 = vmatpush1.msra.mxu0 0.0
        %372 = vmatprep.subr.mxu0 0.0
        %373 = vmatpush1.msra.mxu0 0.0
        %374 = vmatprep.subr.mxu0 0.0
        %375 = vmatpush1.msra.mxu0 0.0
        %376 = vmatprep.subr.mxu0 0.0
        %377 = vmatpush1.msra.mxu0 0.0
        %378 = vmatprep.subr.mxu0 0.0
        %379 = vmatpush1.msra.mxu0 0.0
        %380 = vmatprep.subr.mxu0 0.0
        %381 = vmatpush1.msra.mxu0 0.0
        %382 = vmatprep.subr.mxu0 0.0
        %383 = vmatpush1.msra.mxu0 0.0
        %384 = vmatprep.subr.mxu0 0.0
        %385 = vmatpush1.msra.mxu0 0.0
        %386 = vmatprep.subr.mxu0 0.0
        %387 = vmatpush1.msra.mxu0 0.0
        %388 = vmatprep.subr.mxu0 0.0
        %389 = vmatpush1.msra.mxu0 0.0
        %390 = vmatprep.subr.mxu0 0.0
        %391 = vmatpush1.msra.mxu0 0.0
        %392 = vmatprep.subr.mxu0 0.0
        %393 = vmatpush1.msra.mxu0 0.0
        %394 = vmatprep.subr.mxu0 0.0
        %395 = vmatpush1.msra.mxu0 0.0
        %396 = vmatprep.subr.mxu0 0.0
        %397 = vmatpush1.msra.mxu0 0.0
        %398 = vmatprep.mubr.f32.mxu0 0.0
        %399 = vmatmul.mubr.f32.gmra.mrb[0].mxu0 %v310
        %v400 = vpop.f32.mrb[0].mxu0
        %v401 = vadd.f32 %v332, %v400
        %v402 = vpop.f32.mrb[0].mxu0
        %403 = vdwg.mxu0
        %v404 = vadd.f32 %v401, %v220
        %405 = vst.msk [vmem:[%s215] sm:$0xff] %vm232, %v404
        %s406 = sand.u32 %s137, 1
        %s407 = scalar_lea.sflag [#allocation3], %s406
        %s408 = sand.u32 %s137, 1
        %s409 = smul.addr %s408, 8
        %s410 = scalar_lea.vmem [#allocation2], %s409
        // Predicated region
        $region41: #{tpu_custom_call.1} parent=39 // pred_check
          %p411 = pneg %p147
        $region42: #{tpu_custom_call.1} parent=39 // pred_check_branch
          %413 = sbr.rel (%p411) target = $region44
        $region43: #{tpu_custom_call.1} parent=39 // pred_region
          %s415 = ssub.s32 128, 128
          %416 = vsyncadd %s407, %s415
          %s417 = smul.addr %s19, 128
          %s418 = scalar_lea.hbm %s5, %s417
          %s420 = sshll.u32 %s410, 4
          %s421 = int_to_ptr.vmem [resolvable:$true] %s420
          %423 = dma.vmem_to_hbm [thread:$0]  %s421, 128, %s418, %s407
        $region44: #{tpu_custom_call.1} parent=39 // pred_fallthru
          _
      $region40: #{tpu_custom_call.1} parent=5 // pred_fallthru
        _
      %p424 = scmp.le.s32.totalorder 2, %s14
      // Predicated region
      $region45: #{tpu_custom_call.1} parent=5 // pred_check
        %p425 = pneg %p424
      $region46: #{tpu_custom_call.1} parent=5 // pred_check_branch
        %427 = sbr.rel (%p425) target = $region48
      $region47: #{tpu_custom_call.1} parent=5 // pred_region
        %s428 = ssub.s32 %s14, 2
        // Predicated region
        $region49: #{tpu_custom_call.1} parent=47 // pred_check
          %p429 = pneg %p153
        $region50: #{tpu_custom_call.1} parent=47 // pred_check_branch
          %431 = sbr.rel (%p429) target = $region52
        $region51: #{tpu_custom_call.1} parent=47 // pred_region
          %s432 = sand.u32 %s138, 1
          %s433 = scalar_lea.sflag [#allocation3], %s432
          %s434 = sand.u32 %s138, 1
          %s435 = smul.addr %s434, 8
          %s436 = scalar_lea.vmem [#allocation2], %s435
          %437 = dma.done %s433, 128
        $region52: #{tpu_custom_call.1} parent=47 // pred_fallthru
          _
      $region48: #{tpu_custom_call.1} parent=5 // pred_fallthru
        _
    $region6: #{tpu_custom_call.1} parent=1 // loop_footer
      %s18 = sadd.s32 1, %s14
    $region7: #{tpu_custom_call.1} parent=1 // loop_footer_branch
      %13 = sbr.rel target = $region3
    $region8: #{tpu_custom_call.1} parent=1 // loop_exit
      _
    %438 = vsyncpa [#allocation3], 1
    %s439 = scalar_lea.sflag [#allocation3], 1
    %440 = vsyncpa %s439, 1

</llo_original>
